<compile_context>
chip_gen: v6e
topology: v6e:2x2x1
jax: 0.10.0
libtpu: 0.0.40
codegen_flags: <defaults>
</compile_context>

<pallas_src>
import functools
from typing import NamedTuple

import jax
import jax.numpy as jnp
from jax import lax
from jax.experimental import pallas as pl
from jax.experimental.pallas import tpu as pltpu

SOS_ID = 2
EOS_ID = 3

_VMEM = pl.BlockSpec(memory_space=pltpu.MemorySpace.VMEM)
_UNROLL_LIMIT = 32     # fully unroll the in-kernel time loops up to this many steps


def _round_up(x, m):
    return ((x + m - 1) // m) * m


class Dims(NamedTuple):
    V: int
    E: int
    H: int
    S: int
    Hd: int
    Ep: int
    Hp: int
    Hdp: int
    Vp: int


# -----------------------------------------------------------------------------
# Pallas kernels
# -----------------------------------------------------------------------------
def _matmul_bias_kernel(x_ref, w_ref, b_ref, o_ref):
    o_ref[...] = (jnp.dot(x_ref[...], w_ref[...], preferred_element_type=jnp.float32)
                  + b_ref[...]).astype(o_ref.dtype)


def matmul_bias(x, w, b, out_dtype=jnp.float32):
    """Row-tiled (M,K)@(K,N) + (1,N); weights/bias VMEM-resident, rows streamed."""
    M, K = x.shape
    N = w.shape[1]
    tm = M
    for cand in (512, 256, 128, 64, 32, 16, 8):
        if cand <= M and M % cand == 0:
            tm = cand
            break
    return pl.pallas_call(
        _matmul_bias_kernel,
        grid=(M // tm,),
        in_specs=[pl.BlockSpec((tm, K), lambda i: (i, 0)),
                  pl.BlockSpec((K, N), lambda i: (0, 0)),
                  pl.BlockSpec((1, N), lambda i: (0, 0))],
        out_specs=pl.BlockSpec((tm, N), lambda i: (i, 0)),
        out_shape=jax.ShapeDtypeStruct((M, N), out_dtype),
        compiler_params=pltpu.CompilerParams(dimension_semantics=("parallel",)),
    )(x, w, b)


def _encoder_gru_kernel(gi_ref, len_ref, whh_ref, bhh_ref, outs_ref, hlast_ref):
    """Whole encoder recurrence in one invocation: lax.fori_loop over T carrying the
    (Bp, Hp) hidden state as a loop value (a single vreg at Bp=8, Hp=128).  The input
    projection gi = x@W_ih + b_ih is hoisted outside; only the recurrent matmul +
    gate math run per step.  Outputs stay VMEM-resident and flush once at exit."""
    T, Bp, Hp = outs_ref.shape
    lens = len_ref[...]                       # (Bp, 1) int32
    bhh = bhh_ref[...]                        # (1, 3*Hp) f32

    def step(t, h):
        gi = gi_ref[t]                        # (Bp, 3*Hp) f32, gate-aligned
        gh = jnp.dot(h.astype(jnp.bfloat16), whh_ref[...],
                     preferred_element_type=jnp.float32) + bhh
        r = jax.nn.sigmoid(gi[:, 0 * Hp:1 * Hp] + gh[:, 0 * Hp:1 * Hp])
        z = jax.nn.sigmoid(gi[:, 1 * Hp:2 * Hp] + gh[:, 1 * Hp:2 * Hp])
        n = jnp.tanh(gi[:, 2 * Hp:3 * Hp] + r * gh[:, 2 * Hp:3 * Hp])
        h_new = (1.0 - z) * n + z * h
        valid = t < lens                      # (Bp, 1) pack/pad mask
        h_new = jnp.where(valid, h_new, h)    # freeze hidden past qLengths
        outs_ref[t] = jnp.where(valid, h_new, 0.0)   # pad_packed: zeros past length
        return h_new

    h0 = jnp.zeros((Bp, Hp), jnp.float32)
    h_last = lax.fori_loop(0, T, step, h0, unroll=(T <= _UNROLL_LIMIT))
    hlast_ref[...] = h_last                   # single final-hidden store


def encoder_gru(gi_all, lengths, w_hh, b_hh):
    """gi_all: (T, Bp, 3*Hp) f32 hoisted input projection; lengths: (Bp, 1) int32;
    w_hh: (Hp, 3*Hp) bf16; b_hh: (1, 3*Hp) f32."""
    T, Bp, G = gi_all.shape
    Hp = G // 3
    return pl.pallas_call(
        _encoder_gru_kernel,
        in_specs=[_VMEM, _VMEM, _VMEM, _VMEM],
        out_specs=[_VMEM, _VMEM],
        out_shape=[jax.ShapeDtypeStruct((T, Bp, Hp), jnp.float32),
                   jax.ShapeDtypeStruct((Bp, Hp), jnp.float32)],
    )(gi_all, lengths, w_hh, b_hh)


def _decoder_kernel(gitab_ref, h0_ref, whh_ref, bhh_ref, wout_ref, bout_ref,
                    logits_ref, tok_ref, hlast_ref):
    """Whole greedy decode in one invocation: lax.fori_loop over steps carrying
    (hidden, token).  Embedding lookup + input matmul is a one-hot gather of the
    pre-multiplied gi_table; only max/argmax stays on the serial chain — log_softmax
    runs afterwards in a separate, parallel pass on the raw logits."""
    steps, Bp, Vp = logits_ref.shape
    Hdp = h0_ref.shape[-1]
    bhh = bhh_ref[...]                                    # (1, 3*Hdp) f32
    bout = bout_ref[...]                                  # (1, Vp) f32, pads = -1e30
    lane_i = lax.broadcasted_iota(jnp.int32, (Bp, Vp), 1)
    lane_f = lane_i.astype(jnp.float32)

    def step(t, carry):
        h, tok = carry                                    # (Bp,Hdp) f32, (Bp,1) i32
        # TODO(synk): at realistic vocab, replace this one-hot MXU gather with a
        # per-row DMA gather of gi_table kept in HBM (memory_space=pl.ANY) and tile
        # W_out along V with an online running max/argmax accumulator.
        onehot = (lane_i == tok).astype(jnp.bfloat16)     # exact int compare
        gi = jnp.dot(onehot, gitab_ref[...], preferred_element_type=jnp.float32)
        gh = jnp.dot(h.astype(jnp.bfloat16), whh_ref[...],
                     preferred_element_type=jnp.float32) + bhh
        r = jax.nn.sigmoid(gi[:, 0 * Hdp:1 * Hdp] + gh[:, 0 * Hdp:1 * Hdp])
        z = jax.nn.sigmoid(gi[:, 1 * Hdp:2 * Hdp] + gh[:, 1 * Hdp:2 * Hdp])
        n = jnp.tanh(gi[:, 2 * Hdp:3 * Hdp] + r * gh[:, 2 * Hdp:3 * Hdp])
        h_new = (1.0 - z) * n + z * h

        logits = jnp.dot(h_new.astype(jnp.bfloat16), wout_ref[...],
                         preferred_element_type=jnp.float32) + bout    # (Bp, Vp)

        # Greedy token from raw logits (argmax(logits) == argmax(log_softmax)),
        # first-occurrence tie-break; padded vocab lanes carry -1e30 bias -> never win.
        m = jnp.max(logits, axis=-1, keepdims=True)
        next_tok = jnp.min(jnp.where(logits == m, lane_f, jnp.float32(Vp)),
                           axis=-1, keepdims=True).astype(jnp.int32)   # (Bp, 1)

        logits_ref[t] = logits                # VMEM-resident; single HBM flush at exit
        tok_ref[t] = next_tok
        return (h_new, next_tok)

    tok0 = jnp.full((Bp, 1), SOS_ID, jnp.int32)
    h_last, _ = lax.fori_loop(0, steps, step, (h0_ref[...], tok0),
                              unroll=(steps <= _UNROLL_LIMIT))
    hlast_ref[...] = h_last                   # single final-hidden store


def fused_greedy_decoder(gi_table, h0, w_hh, b_hh, w_out, b_out, *, steps):
    Bp, Hdp = h0.shape
    Vp = w_out.shape[1]
    return pl.pallas_call(
        _decoder_kernel,
        in_specs=[_VMEM] * 6,
        out_specs=[_VMEM, _VMEM, _VMEM],
        out_shape=[jax.ShapeDtypeStruct((steps, Bp, Vp), jnp.float32),   # raw logits
                   jax.ShapeDtypeStruct((steps, Bp, 1), jnp.int32),      # greedy tokens
                   jax.ShapeDtypeStruct((Bp, Hdp), jnp.float32)],        # final hidden
    )(gi_table, h0, w_hh, b_hh, w_out, b_out)


def _log_softmax_kernel(x_ref, o_ref):
    x = x_ref[...]
    m = jnp.max(x, axis=-1, keepdims=True)
    s = x - m
    o_ref[...] = s - jnp.log(jnp.sum(jnp.exp(s), axis=-1, keepdims=True))


def log_softmax_pallas(x):
    """Trivially parallel normalization pass over (steps, Bp, Vp) raw logits."""
    T, Bp, Vp = x.shape
    return pl.pallas_call(
        _log_softmax_kernel,
        grid=(T,),
        in_specs=[pl.BlockSpec((1, Bp, Vp), lambda t: (t, 0, 0))],
        out_specs=pl.BlockSpec((1, Bp, Vp), lambda t: (t, 0, 0)),
        out_shape=jax.ShapeDtypeStruct((T, Bp, Vp), jnp.float32),
        compiler_params=pltpu.CompilerParams(dimension_semantics=("parallel",)),
    )(x)


# -----------------------------------------------------------------------------
# Parameter construction (deterministic, synthetic)
# -----------------------------------------------------------------------------
def init_params(key, vocab_size, hidden_size, style_size):
    dec_hidden = hidden_size + style_size      # (hidden+style)*(bidir+1), bidir=False
    ks = jax.random.split(key, 12)

    def u(k, shape, scale):
        return jax.random.uniform(k, shape, jnp.float32, -scale, scale)

    se = 1.0 / jnp.sqrt(hidden_size)
    sd = 1.0 / jnp.sqrt(dec_hidden)
    return dict(
        emb=u(ks[0], (vocab_size, hidden_size), 0.1),       # encoder embedding (frozen)
        style_emb=u(ks[1], (7, style_size), 0.1),           # nn.Embedding(7, style_size)
        dec_emb=u(ks[2], (vocab_size, dec_hidden), 0.1),    # decoder embedding
        # encoder GRU (input E=hidden_size, hidden H=hidden_size), weights (in, 3H)
        enc_w_ih=u(ks[3], (hidden_size, 3 * hidden_size), se),
        enc_w_hh=u(ks[4], (hidden_size, 3 * hidden_size), se),
        enc_b_ih=u(ks[5], (1, 3 * hidden_size), se),
        enc_b_hh=u(ks[6], (1, 3 * hidden_size), se),
        # decoder GRU (input = hidden = dec_hidden)
        dec_w_ih=u(ks[7], (dec_hidden, 3 * dec_hidden), sd),
        dec_w_hh=u(ks[8], (dec_hidden, 3 * dec_hidden), sd),
        dec_b_ih=u(ks[9], (1, 3 * dec_hidden), sd),
        dec_b_hh=u(ks[10], (1, 3 * dec_hidden), sd),
        # output projection Linear(dec_hidden, vocab)
        out_w=u(ks[11], (dec_hidden, vocab_size), sd),
        out_b=jnp.zeros((1, vocab_size), jnp.float32),
    )


def _pad2(x, shape):
    return jnp.pad(x, [(0, s - d) for d, s in zip(x.shape, shape)])


def _pad_gru_w(w, in_pad, h, h_pad):
    """(in, 3*h) -> (in_pad, 3*h_pad), gate-aligned (gate g at cols [g*h_pad:...])."""
    in_dim = w.shape[0]
    wg = w.reshape(in_dim, 3, h)
    wg = jnp.pad(wg, ((0, in_pad - in_dim), (0, 0), (0, h_pad - h)))
    return wg.reshape(in_pad, 3 * h_pad)


def _pad_gru_b(b, h, h_pad):
    bg = b.reshape(1, 3, h)
    bg = jnp.pad(bg, ((0, 0), (0, 0), (0, h_pad - h)))
    return bg.reshape(1, 3 * h_pad)


def prepare_params(params):
    """One-time prep: lane/gate-aligned padding, bf16 casts of MXU weight operands,
    and the decoder gi_table = dec_emb @ W_ih + b_ih pre-multiplication.  Hoisted out
    of the per-call forward (perf review)."""
    V, E = params["emb"].shape
    H = params["enc_w_hh"].shape[0]
    S = params["style_emb"].shape[1]
    Hd = H + S
    dims = Dims(V=V, E=E, H=H, S=S, Hd=Hd,
                Ep=_round_up(E, 128), Hp=_round_up(H, 128),
                Hdp=_round_up(Hd, 128), Vp=_round_up(V, 128))

    emb_p = _pad2(params["emb"], (V, dims.Ep))
    enc_w_ih = _pad_gru_w(params["enc_w_ih"], dims.Ep, H, dims.Hp).astype(jnp.bfloat16)
    enc_w_hh = _pad_gru_w(params["enc_w_hh"], dims.Hp, H, dims.Hp).astype(jnp.bfloat16)
    enc_b_ih = _pad_gru_b(params["enc_b_ih"], H, dims.Hp)
    enc_b_hh = _pad_gru_b(params["enc_b_hh"], H, dims.Hp)

    dec_emb_p = _pad2(params["dec_emb"], (dims.Vp, dims.Hdp))
    dec_w_ih = _pad_gru_w(params["dec_w_ih"], dims.Hdp, Hd, dims.Hdp)      # f32 (prep only)
    dec_w_hh = _pad_gru_w(params["dec_w_hh"], dims.Hdp, Hd, dims.Hdp).astype(jnp.bfloat16)
    dec_b_ih = _pad_gru_b(params["dec_b_ih"], Hd, dims.Hdp)
    dec_b_hh = _pad_gru_b(params["dec_b_hh"], Hd, dims.Hdp)

    out_w = _pad2(params["out_w"], (dims.Hdp, dims.Vp)).astype(jnp.bfloat16)
    # padded vocab lanes get a huge negative bias: never win argmax, exp() -> 0.
    out_b = jnp.pad(params["out_b"], ((0, 0), (0, dims.Vp - V)), constant_values=-1e30)

    # one-time premultiply: gi_table[v] = dec_emb[v] @ W_ih + b_ih (f32), stored bf16.
    gi_table = matmul_bias(dec_emb_p, dec_w_ih, dec_b_ih).astype(jnp.bfloat16)

    prep = dict(emb=emb_p, style_emb=params["style_emb"],
                enc_w_ih=enc_w_ih, enc_w_hh=enc_w_hh,
                enc_b_ih=enc_b_ih, enc_b_hh=enc_b_hh,
                gi_table=gi_table, dec_w_hh=dec_w_hh, dec_b_hh=dec_b_hh,
                out_w=out_w, out_b=out_b)
    return prep, dims


# -----------------------------------------------------------------------------
# Forward pass (eval mode: teacher_forcing_ratio forced to 0 -> greedy decode)
# -----------------------------------------------------------------------------
@functools.partial(jax.jit, static_argnames=("dims", "outputs_maxlen"))
def seq2seq_forward(prep, question, q_lengths, labels_r, *, dims, outputs_maxlen):
    """question: (B, Tq) int32, q_lengths: (B,) int32, labels_r: (B,) int32."""
    B, Tq = question.shape
    Bp = _round_up(max(B, 8), 8)      # sublane alignment

    # ---- pad batch-shaped inputs ----
    q_p = jnp.zeros((Bp, Tq), jnp.int32).at[:B].set(question.astype(jnp.int32))
    len_p = jnp.zeros((Bp,), jnp.int32).at[:B].set(q_lengths.astype(jnp.int32))
    lab_p = jnp.zeros((Bp,), jnp.int32).at[:B].set(labels_r.astype(jnp.int32))

    # ---------------- encoder ----------------
    x_emb = jnp.take(prep["emb"], q_p, axis=0)                # (Bp, Tq, Ep) glue gather
    x_tm = jnp.transpose(x_emb, (1, 0, 2)).astype(jnp.bfloat16)   # time-major
    # hoisted input projection: one dense (Tq*Bp, Ep)x(Ep, 3Hp) Pallas matmul
    gi_all = matmul_bias(x_tm.reshape(Tq * Bp, dims.Ep),
                         prep["enc_w_ih"], prep["enc_b_ih"])
    gi_all = gi_all.reshape(Tq, Bp, 3 * dims.Hp)
    enc_outs_p, enc_hidden_p = encoder_gru(gi_all, len_p[:, None],
                                           prep["enc_w_hh"], prep["enc_b_hh"])
    encoder_outputs = jnp.transpose(enc_outs_p, (1, 0, 2))[:B, :, :dims.H]   # (B, Tq, H)

    # ---------------- style embedding + decoder initial hidden ----------------
    style = jnp.take(prep["style_emb"], lab_p, axis=0)        # (Bp, S)
    h0 = jnp.zeros((Bp, dims.Hdp), jnp.float32)
    h0 = h0.at[:, :dims.H].set(enc_hidden_p[:, :dims.H])
    h0 = h0.at[:, dims.H:dims.H + dims.S].set(style)          # concat(enc_h, style)

    # ---------------- decoder: fused greedy decode + parallel log_softmax ----
    logits_p, tok_p, hlast_p = fused_greedy_decoder(
        prep["gi_table"], h0, prep["dec_w_hh"], prep["dec_b_hh"],
        prep["out_w"], prep["out_b"], steps=outputs_maxlen)
    logp_p = log_softmax_pallas(logits_p)                     # out of the serial loop

    decoder_outputs = logp_p[:, :B, :dims.V]       # (T_dec, B, vocab) log-probs
    decoder_hidden = hlast_p[None, :B, :dims.Hd]   # (num_layers*dirs=1, B, Hd)
    ret_dict = {"sequence": tok_p[:, :B, 0],       # (T_dec, B) predicted token ids
                "length": jnp.full((B,), outputs_maxlen, jnp.int32)}
    return decoder_outputs, decoder_hidden, ret_dict, encoder_outputs


# -----------------------------------------------------------------------------
if __name__ == "__main__":
    VOCAB = 50
    HIDDEN = 32
    STYLE = 16
    B = 2
    TQ = 8
    TR = 8

    key = jax.random.PRNGKey(0)
    pkey, qkey, lkey = jax.random.split(key, 3)

    params = init_params(pkey, VOCAB, HIDDEN, STYLE)
    prep, dims = prepare_params(params)          # one-time: padding + gi_table premult

    question = jax.random.randint(qkey, (B, TQ), 0, VOCAB, dtype=jnp.int32)
    q_lengths = jnp.array([TQ, 5], dtype=jnp.int32)          # variable-length questions
    r_lengths = [TR, 6]                                      # outputs_maxlen = max = TR
    labels_r = jax.random.randint(lkey, (B,), 0, 7, dtype=jnp.int32)

    dec_out, dec_hidden, ret, enc_out = seq2seq_forward(
        prep, question, q_lengths, labels_r,
        dims=dims, outputs_maxlen=max(r_lengths))

    jax.block_until_ready((dec_out, dec_hidden, ret, enc_out))

    assert dec_out.shape == (TR, B, VOCAB)
    assert dec_hidden.shape == (1, B, HIDDEN + STYLE)
    assert ret["sequence"].shape == (TR, B)
    assert enc_out.shape == (B, TQ, HIDDEN)
    # log_softmax rows must sum to 1 in prob space
    assert jnp.allclose(jnp.sum(jnp.exp(dec_out), axis=-1), 1.0, atol=1e-4)
    # predicted tokens must be valid vocab ids (padded lanes can never win argmax)
    assert int(jnp.max(ret["sequence"])) < VOCAB

    print("KERNEL_OK")
</pallas_src>

<mosaic_0001>
module attributes {stable_mosaic.version = 11 : i64} {
  func.func @_matmul_bias_kernel(%arg0: i32, %arg1: memref<128x128xf32, #tpu.memory_space<vmem>>, %arg2: memref<128x384xf32, #tpu.memory_space<vmem>>, %arg3: memref<1x384xf32, #tpu.memory_space<vmem>>, %arg4: memref<128x384xf32, #tpu.memory_space<vmem>>) attributes {dimension_semantics = [#tpu.dimension_semantics<parallel>], iteration_bounds = array<i64: 1>, scalar_prefetch = 0 : i64, scratch_operands = 0 : i64, tpu.core_type = #tpu.core_type<tc>, window_params = [{transform_indices = @transform_0, window_bounds = array<i64: 128, 128>}, {pipeline_mode = #tpu.pipeline_mode<synchronous>, transform_indices = @transform_1, window_bounds = array<i64: 128, 384>}, {pipeline_mode = #tpu.pipeline_mode<synchronous>, transform_indices = @transform_2, window_bounds = array<i64: 1, 384>}, {transform_indices = @transform_3, window_bounds = array<i64: 128, 384>}]} {
    %c0 = arith.constant 0 : index
    %c0_0 = arith.constant 0 : index
    %0 = vector.load %arg1[%c0, %c0_0] : memref<128x128xf32, #tpu.memory_space<vmem>>, vector<128x128xf32>
    %c0_1 = arith.constant 0 : index
    %c0_2 = arith.constant 0 : index
    %1 = vector.load %arg2[%c0_1, %c0_2] : memref<128x384xf32, #tpu.memory_space<vmem>>, vector<128x384xf32>
    %cst = arith.constant dense<0.000000e+00> : vector<128x384xf32>
    %2 = tpu.matmul %0, %1, %cst {dimension_numbers = #tpu.dot_dimension_numbers<[1], [0], [0], [1], [0, 0, 1, 1], [], []>} : vector<128x128xf32>, vector<128x384xf32>, vector<128x384xf32> -> vector<128x384xf32>
    %c0_3 = arith.constant 0 : index
    %c0_4 = arith.constant 0 : index
    %3 = vector.load %arg3[%c0_3, %c0_4] : memref<1x384xf32, #tpu.memory_space<vmem>>, vector<1x384xf32>
    %4 = vector.broadcast %3 : vector<1x384xf32> to vector<128x384xf32>
    %5 = arith.addf %2, %4 : vector<128x384xf32>
    %c0_5 = arith.constant 0 : index
    %c0_6 = arith.constant 0 : index
    %6 = vector.load %arg4[%c0_5, %c0_6] : memref<128x384xf32, #tpu.memory_space<vmem>>, vector<128x384xf32>
    tpu.vector_store %arg4[%c0_5, %c0_6], %5 {strides = array<i32>} : memref<128x384xf32, #tpu.memory_space<vmem>>, vector<128x384xf32>,
    return
  }
  func.func @transform_0(%arg0: i32) -> (i32, i32) {
    %c0_i32 = arith.constant 0 : i32
    %c0_i32_0 = arith.constant 0 : i32
    return %arg0, %c0_i32 : i32, i32
  }
  func.func @transform_1(%arg0: i32) -> (i32, i32) {
    %c0_i32 = arith.constant 0 : i32
    %c0_i32_0 = arith.constant 0 : i32
    %c0_i32_1 = arith.constant 0 : i32
    return %c0_i32, %c0_i32_0 : i32, i32
  }
  func.func @transform_2(%arg0: i32) -> (i32, i32) {
    %c0_i32 = arith.constant 0 : i32
    %c0_i32_0 = arith.constant 0 : i32
    %c0_i32_1 = arith.constant 0 : i32
    return %c0_i32, %c0_i32_0 : i32, i32
  }
  func.func @transform_3(%arg0: i32) -> (i32, i32) {
    %c0_i32 = arith.constant 0 : i32
    %c0_i32_0 = arith.constant 0 : i32
    return %arg0, %c0_i32 : i32, i32
  }
}

</mosaic_0001>

<llo_original>
// kernel: tpu_custom_call.1
$region0: #{tpu_custom_call.1}
  #allocation0 [shape = 'u32[]', space=smem, size = 0x4, offset = 0x4, fixed_abs, tag = 'smem constant byte address 0x4 - core index']
  #allocation1 [shape = 'u32[144,128]{1,0:T(1,128)}', space=vmem, size = 0x12000, scoped, tag = 'internal scratch']
  %s0 = inlined_call_operand.hbm [shape: f32[128,128], index: 0, kind: input, shape index: {}]
  %s1 = inlined_call_operand.hbm [shape: f32[128,384], index: 1, kind: input, shape index: {}]
  %s2 = inlined_call_operand.vmem [shape: f32[1,384], index: 2, kind: input, shape index: {}]
  %s3 = inlined_call_operand.hbm [shape: f32[128,384], index: 3, kind: output, shape index: {}]
  %s4 = sld [smem:[#allocation0]]
  $region30: #{tpu_custom_call.1} parent=0
    _
  %s6 = ssub.s32 1, %s4
  %s7 = scalar_select 0, %s6, %s4
  $region1: #{tpu_custom_call.1} parent=0
    #allocation2 [shape = 'u8[65536]{0}', space=vmem, size = 0x10000, scoped, tag = 'input window, operand 0, single buffered']
    #allocation3 [shape = 's32[1]{0}', space=sflag, size = 0x4, scoped, tag = 'scoped memory for tpu_custom_call.1']
    #allocation4 [shape = 's32[1]{0}', space=sflag, size = 0x4, scoped, tag = 'scoped memory for tpu_custom_call.1']
    #allocation5 [shape = 'u8[196608]{0}', space=vmem, size = 0x30000, scoped, tag = 'input window, operand 1, single buffered']
    #allocation6 [shape = 's32[1]{0}', space=sflag, size = 0x4, scoped, tag = 'scoped memory for tpu_custom_call.1']
    #allocation7 [shape = 'u8[196608]{0}', space=vmem, size = 0x30000, scoped, tag = 'output window, operand 0, single buffered']
    %8 = vsyncpa [#allocation3], 0
    %9 = vsyncpa [#allocation6], 0
    %10 = vsyncpa [#allocation4], 0
    // Predicated region
    $region2: #{tpu_custom_call.1} parent=1 // pred_check
      _
    $region3: #{tpu_custom_call.1} parent=1 // pred_check_branch
      %12 = sbr.rel (0) target = $region5
    $region4: #{tpu_custom_call.1} parent=1 // pred_region
      %s14 = ssub.s32 2048, 2048
      %15 = vsyncadd [#allocation3], %s14
      %s16 = sshll.u32 [#allocation2], 4
      %s17 = int_to_ptr.vmem [resolvable:$true] %s16
      %22 = dma.hbm_to_vmem [thread:$0]  %s0, 2048, %s17, [#allocation3], 128, 128, 8
    $region5: #{tpu_custom_call.1} parent=1 // pred_fallthru
      _
    // Predicated region
    $region6: #{tpu_custom_call.1} parent=1 // pred_check
      _
    $region7: #{tpu_custom_call.1} parent=1 // pred_check_branch
      %24 = sbr.rel (0) target = $region9
    $region8: #{tpu_custom_call.1} parent=1 // pred_region
      %s26 = ssub.s32 6144, 6144
      %27 = vsyncadd [#allocation6], %s26
      %s28 = sshll.u32 [#allocation5], 4
      %s29 = int_to_ptr.vmem [resolvable:$true] %s28
      %34 = dma.hbm_to_vmem [thread:$0]  %s1, 6144, %s29, [#allocation6], 384, 384, 24
    $region9: #{tpu_custom_call.1} parent=1 // pred_fallthru
      _
    // Predicated region
    $region10: #{tpu_custom_call.1} parent=1 // pred_check
      _
    $region11: #{tpu_custom_call.1} parent=1 // pred_check_branch
      %36 = sbr.rel (0) target = $region13
    $region12: #{tpu_custom_call.1} parent=1 // pred_region
      _
    $region13: #{tpu_custom_call.1} parent=1 // pred_fallthru
      _
    // Predicated region
    $region14: #{tpu_custom_call.1} parent=1 // pred_check
      _
    $region15: #{tpu_custom_call.1} parent=1 // pred_check_branch
      %38 = sbr.rel (0) target = $region17
    $region16: #{tpu_custom_call.1} parent=1 // pred_region
      %39 = dma.done [#allocation3], 2048
    $region17: #{tpu_custom_call.1} parent=1 // pred_fallthru
      _
    // Predicated region
    $region18: #{tpu_custom_call.1} parent=1 // pred_check
      _
    $region19: #{tpu_custom_call.1} parent=1 // pred_check_branch
      %41 = sbr.rel (0) target = $region21
    $region20: #{tpu_custom_call.1} parent=1 // pred_region
      %42 = dma.done [#allocation6], 6144
    $region21: #{tpu_custom_call.1} parent=1 // pred_fallthru
      _
    %v43 = vld [vmem:[#allocation2] sm:$0xff]
    %v44 = vld [vmem:[#allocation2 + $0x8] sm:$0xff]
    %v45 = vld [vmem:[#allocation2 + $0x10] sm:$0xff]
    %v46 = vld [vmem:[#allocation2 + $0x18] sm:$0xff]
    %v47 = vld [vmem:[#allocation2 + $0x20] sm:$0xff]
    %v48 = vld [vmem:[#allocation2 + $0x28] sm:$0xff]
    %v49 = vld [vmem:[#allocation2 + $0x30] sm:$0xff]
    %v50 = vld [vmem:[#allocation2 + $0x38] sm:$0xff]
    %v51 = vld [vmem:[#allocation2 + $0x40] sm:$0xff]
    %v52 = vld [vmem:[#allocation2 + $0x48] sm:$0xff]
    %v53 = vld [vmem:[#allocation2 + $0x50] sm:$0xff]
    %v54 = vld [vmem:[#allocation2 + $0x58] sm:$0xff]
    %v55 = vld [vmem:[#allocation2 + $0x60] sm:$0xff]
    %v56 = vld [vmem:[#allocation2 + $0x68] sm:$0xff]
    %v57 = vld [vmem:[#allocation2 + $0x70] sm:$0xff]
    %v58 = vld [vmem:[#allocation2 + $0x78] sm:$0xff]
    %v59 = vld [vmem:[#allocation5] sm:$0xff]
    %v60 = vld [vmem:[#allocation5 + $0x8] sm:$0xff]
    %v61 = vld [vmem:[#allocation5 + $0x10] sm:$0xff]
    %v62 = vld [vmem:[#allocation5 + $0x18] sm:$0xff]
    %v63 = vld [vmem:[#allocation5 + $0x20] sm:$0xff]
    %v64 = vld [vmem:[#allocation5 + $0x28] sm:$0xff]
    %v65 = vld [vmem:[#allocation5 + $0x30] sm:$0xff]
    %v66 = vld [vmem:[#allocation5 + $0x38] sm:$0xff]
    %v67 = vld [vmem:[#allocation5 + $0x40] sm:$0xff]
    %v68 = vld [vmem:[#allocation5 + $0x48] sm:$0xff]
    %v69 = vld [vmem:[#allocation5 + $0x50] sm:$0xff]
    %v70 = vld [vmem:[#allocation5 + $0x58] sm:$0xff]
    %v71 = vld [vmem:[#allocation5 + $0x60] sm:$0xff]
    %v72 = vld [vmem:[#allocation5 + $0x68] sm:$0xff]
    %v73 = vld [vmem:[#allocation5 + $0x70] sm:$0xff]
    %v74 = vld [vmem:[#allocation5 + $0x78] sm:$0xff]
    %v75 = vld [vmem:[#allocation5 + $0x80] sm:$0xff]
    %v76 = vld [vmem:[#allocation5 + $0x88] sm:$0xff]
    %v77 = vld [vmem:[#allocation5 + $0x90] sm:$0xff]
    %v78 = vld [vmem:[#allocation5 + $0x98] sm:$0xff]
    %v79 = vld [vmem:[#allocation5 + $0xa0] sm:$0xff]
    %v80 = vld [vmem:[#allocation5 + $0xa8] sm:$0xff]
    %v81 = vld [vmem:[#allocation5 + $0xb0] sm:$0xff]
    %v82 = vld [vmem:[#allocation5 + $0xb8] sm:$0xff]
    %v83 = vld [vmem:[#allocation5 + $0xc0] sm:$0xff]
    %v84 = vld [vmem:[#allocation5 + $0xc8] sm:$0xff]
    %v85 = vld [vmem:[#allocation5 + $0xd0] sm:$0xff]
    %v86 = vld [vmem:[#allocation5 + $0xd8] sm:$0xff]
    %v87 = vld [vmem:[#allocation5 + $0xe0] sm:$0xff]
    %v88 = vld [vmem:[#allocation5 + $0xe8] sm:$0xff]
    %v89 = vld [vmem:[#allocation5 + $0xf0] sm:$0xff]
    %v90 = vld [vmem:[#allocation5 + $0xf8] sm:$0xff]
    %v91 = vld [vmem:[#allocation5 + $0x100] sm:$0xff]
    %v92 = vld [vmem:[#allocation5 + $0x108] sm:$0xff]
    %v93 = vld [vmem:[#allocation5 + $0x110] sm:$0xff]
    %v94 = vld [vmem:[#allocation5 + $0x118] sm:$0xff]
    %v95 = vld [vmem:[#allocation5 + $0x120] sm:$0xff]
    %v96 = vld [vmem:[#allocation5 + $0x128] sm:$0xff]
    %v97 = vld [vmem:[#allocation5 + $0x130] sm:$0xff]
    %v98 = vld [vmem:[#allocation5 + $0x138] sm:$0xff]
    %v99 = vld [vmem:[#allocation5 + $0x140] sm:$0xff]
    %v100 = vld [vmem:[#allocation5 + $0x148] sm:$0xff]
    %v101 = vld [vmem:[#allocation5 + $0x150] sm:$0xff]
    %v102 = vld [vmem:[#allocation5 + $0x158] sm:$0xff]
    %v103 = vld [vmem:[#allocation5 + $0x160] sm:$0xff]
    %v104 = vld [vmem:[#allocation5 + $0x168] sm:$0xff]
    %v105 = vld [vmem:[#allocation5 + $0x170] sm:$0xff]
    %v106 = vld [vmem:[#allocation5 + $0x178] sm:$0xff]
    %v107 = vld [vmem:[%s2] sm:$0x7]
    %v109 = vlaneseq
    %v110 = vshrl.u32 %v109, 7
    %v111 = vsub.s32 0, %v110
    %v112 = vrot.slane %v107, %v111
    %v113 = vlaneseq
    %v114 = vshrl.u32 %v113, 7
    %v115 = vsub.s32 1, %v114
    %v116 = vrot.slane %v107, %v115
    %v117 = vlaneseq
    %v118 = vshrl.u32 %v117, 7
    %v119 = vsub.s32 2, %v118
    %v120 = vrot.slane %v107, %v119
    %124 = vmatprep.subr.mxu0 %v105
    %125 = vmatpush1.msra.mxu0 %v104
    %126 = vmatprep.subr.mxu0 %v102
    %127 = vmatpush1.msra.mxu0 %v101
    %128 = vmatprep.subr.mxu0 %v99
    %129 = vmatpush1.msra.mxu0 %v98
    %130 = vmatprep.subr.mxu0 %v96
    %131 = vmatpush1.msra.mxu0 %v95
    %132 = vmatprep.subr.mxu0 %v93
    %133 = vmatpush1.msra.mxu0 %v92
    %134 = vmatprep.subr.mxu0 %v90
    %135 = vmatpush1.msra.mxu0 %v89
    %136 = vmatprep.subr.mxu0 %v87
    %137 = vmatpush1.msra.mxu0 %v86
    %138 = vmatprep.subr.mxu0 %v84
    %139 = vmatpush1.msra.mxu0 %v83
    %140 = vmatprep.subr.mxu0 %v81
    %141 = vmatpush1.msra.mxu0 %v80
    %142 = vmatprep.subr.mxu0 %v78
    %143 = vmatpush1.msra.mxu0 %v77
    %144 = vmatprep.subr.mxu0 %v75
    %145 = vmatpush1.msra.mxu0 %v74
    %146 = vmatprep.subr.mxu0 %v72
    %147 = vmatpush1.msra.mxu0 %v71
    %148 = vmatprep.subr.mxu0 %v69
    %149 = vmatpush1.msra.mxu0 %v68
    %150 = vmatprep.subr.mxu0 %v66
    %151 = vmatpush1.msra.mxu0 %v65
    %152 = vmatprep.subr.mxu0 %v63
    %153 = vmatpush1.msra.mxu0 %v62
    %154 = vmatprep.subr.mxu0 %v60
    %155 = vmatpush1.msra.mxu0 %v59
    %156 = vmatprep.subr.mxu0 0.0
    %157 = vmatpush2.msra.mxu0 0.0
    %158 = vmatprep.subr.mxu0 0.0
    %159 = vmatpush2.msra.mxu0 0.0
    %160 = vmatprep.subr.mxu0 0.0
    %161 = vmatpush2.msra.mxu0 0.0
    %162 = vmatprep.subr.mxu0 0.0
    %163 = vmatpush2.msra.mxu0 0.0
    %164 = vmatprep.subr.mxu0 0.0
    %165 = vmatpush2.msra.mxu0 0.0
    %166 = vmatprep.subr.mxu0 0.0
    %167 = vmatpush2.msra.mxu0 0.0
    %168 = vmatprep.subr.mxu0 0.0
    %169 = vmatpush2.msra.mxu0 0.0
    %170 = vmatprep.subr.mxu0 0.0
    %171 = vmatpush2.msra.mxu0 0.0
    %172 = vmatprep.subr.mxu0 0.0
    %173 = vmatpush2.msra.mxu0 0.0
    %174 = vmatprep.subr.mxu0 0.0
    %175 = vmatpush2.msra.mxu0 0.0
    %176 = vmatprep.subr.mxu0 0.0
    %177 = vmatpush2.msra.mxu0 0.0
    %178 = vmatprep.subr.mxu0 0.0
    %179 = vmatpush2.msra.mxu0 0.0
    %180 = vmatprep.subr.mxu0 0.0
    %181 = vmatpush2.msra.mxu0 0.0
    %182 = vmatprep.subr.mxu0 0.0
    %183 = vmatpush2.msra.mxu0 0.0
    %184 = vmatprep.subr.mxu0 0.0
    %185 = vmatpush2.msra.mxu0 0.0
    %186 = vmatprep.subr.mxu0 0.0
    %187 = vmatpush2.msra.mxu0 0.0
    %188 = vmatprep.mubr.f32.mxu0 0.0
    %189 = vmatmul.mubr.f32.gmra.mxu0 %v43
    %v190 = vpop.f32.mrf.mxu0
    %v191 = vadd.f32 %v112, %v190
    %v192 = vpop.f32.mrf.mxu0
    %v193 = vadd.f32 %v116, %v192
    %194 = vmatprep.mubr.f32.mxu0 0.0
    %195 = vmatmul.mubr.f32.gmra.mxu0 %v44
    %v196 = vpop.f32.mrf.mxu0
    %v197 = vadd.f32 %v112, %v196
    %v198 = vpop.f32.mrf.mxu0
    %v199 = vadd.f32 %v116, %v198
    %200 = vmatprep.mubr.f32.mxu0 0.0
    %201 = vmatmul.mubr.f32.gmra.mxu0 %v45
    %v202 = vpop.f32.mrf.mxu0
    %v203 = vadd.f32 %v112, %v202
    %v204 = vpop.f32.mrf.mxu0
    %v205 = vadd.f32 %v116, %v204
    %206 = vmatprep.mubr.f32.mxu0 0.0
    %207 = vmatmul.mubr.f32.gmra.mxu0 %v46
    %v208 = vpop.f32.mrf.mxu0
    %v209 = vadd.f32 %v112, %v208
    %v210 = vpop.f32.mrf.mxu0
    %v211 = vadd.f32 %v116, %v210
    %212 = vmatprep.mubr.f32.mxu0 0.0
    %213 = vmatmul.mubr.f32.gmra.mxu0 %v47
    %v214 = vpop.f32.mrf.mxu0
    %v215 = vadd.f32 %v112, %v214
    %v216 = vpop.f32.mrf.mxu0
    %v217 = vadd.f32 %v116, %v216
    %218 = vmatprep.mubr.f32.mxu0 0.0
    %219 = vmatmul.mubr.f32.gmra.mxu0 %v48
    %v220 = vpop.f32.mrf.mxu0
    %v221 = vadd.f32 %v112, %v220
    %v222 = vpop.f32.mrf.mxu0
    %v223 = vadd.f32 %v116, %v222
    %224 = vmatprep.mubr.f32.mxu0 0.0
    %225 = vmatmul.mubr.f32.gmra.mxu0 %v49
    %v226 = vpop.f32.mrf.mxu0
    %v227 = vadd.f32 %v112, %v226
    %v228 = vpop.f32.mrf.mxu0
    %v229 = vadd.f32 %v116, %v228
    %230 = vmatprep.mubr.f32.mxu0 0.0
    %231 = vmatmul.mubr.f32.gmra.mxu0 %v50
    %v232 = vpop.f32.mrf.mxu0
    %v233 = vadd.f32 %v112, %v232
    %v234 = vpop.f32.mrf.mxu0
    %v235 = vadd.f32 %v116, %v234
    %236 = vmatprep.mubr.f32.mxu0 0.0
    %237 = vmatmul.mubr.f32.gmra.mxu0 %v51
    %v238 = vpop.f32.mrf.mxu0
    %v239 = vadd.f32 %v112, %v238
    %v240 = vpop.f32.mrf.mxu0
    %v241 = vadd.f32 %v116, %v240
    %242 = vmatprep.mubr.f32.mxu0 0.0
    %243 = vmatmul.mubr.f32.gmra.mxu0 %v52
    %v244 = vpop.f32.mrf.mxu0
    %v245 = vadd.f32 %v112, %v244
    %v246 = vpop.f32.mrf.mxu0
    %v247 = vadd.f32 %v116, %v246
    %248 = vmatprep.mubr.f32.mxu0 0.0
    %249 = vmatmul.mubr.f32.gmra.mxu0 %v53
    %v250 = vpop.f32.mrf.mxu0
    %v251 = vadd.f32 %v112, %v250
    %v252 = vpop.f32.mrf.mxu0
    %v253 = vadd.f32 %v116, %v252
    %254 = vmatprep.mubr.f32.mxu0 0.0
    %255 = vmatmul.mubr.f32.gmra.mxu0 %v54
    %v256 = vpop.f32.mrf.mxu0
    %v257 = vadd.f32 %v112, %v256
    %v258 = vpop.f32.mrf.mxu0
    %v259 = vadd.f32 %v116, %v258
    %260 = vmatprep.mubr.f32.mxu0 0.0
    %261 = vmatmul.mubr.f32.gmra.mxu0 %v55
    %v262 = vpop.f32.mrf.mxu0
    %v263 = vadd.f32 %v112, %v262
    %v264 = vpop.f32.mrf.mxu0
    %v265 = vadd.f32 %v116, %v264
    %266 = vmatprep.mubr.f32.mxu0 0.0
    %267 = vmatmul.mubr.f32.gmra.mxu0 %v56
    %v268 = vpop.f32.mrf.mxu0
    %v269 = vadd.f32 %v112, %v268
    %v270 = vpop.f32.mrf.mxu0
    %v271 = vadd.f32 %v116, %v270
    %272 = vmatprep.mubr.f32.mxu0 0.0
    %273 = vmatmul.mubr.f32.gmra.mxu0 %v57
    %v274 = vpop.f32.mrf.mxu0
    %v275 = vadd.f32 %v112, %v274
    %v276 = vpop.f32.mrf.mxu0
    %v277 = vadd.f32 %v116, %v276
    %278 = vmatprep.mubr.f32.mxu0 0.0
    %279 = vmatmul.mubr.f32.gmra.mxu0 %v58
    %v280 = vpop.f32.mrf.mxu0
    %v281 = vadd.f32 %v112, %v280
    %v282 = vpop.f32.mrf.mxu0
    %v283 = vadd.f32 %v116, %v282
    %284 = vdwg.mxu0
    %285 = vmatprep.subr.mxu0 0.0
    %286 = vmatpush1.msra.mxu0 %v106
    %287 = vmatprep.subr.mxu0 0.0
    %288 = vmatpush1.msra.mxu0 %v103
    %289 = vmatprep.subr.mxu0 0.0
    %290 = vmatpush1.msra.mxu0 %v100
    %291 = vmatprep.subr.mxu0 0.0
    %292 = vmatpush1.msra.mxu0 %v97
    %293 = vmatprep.subr.mxu0 0.0
    %294 = vmatpush1.msra.mxu0 %v94
    %295 = vmatprep.subr.mxu0 0.0
    %296 = vmatpush1.msra.mxu0 %v91
    %297 = vmatprep.subr.mxu0 0.0
    %298 = vmatpush1.msra.mxu0 %v88
    %299 = vmatprep.subr.mxu0 0.0
    %300 = vmatpush1.msra.mxu0 %v85
    %301 = vmatprep.subr.mxu0 0.0
    %302 = vmatpush1.msra.mxu0 %v82
    %303 = vmatprep.subr.mxu0 0.0
    %304 = vmatpush1.msra.mxu0 %v79
    %305 = vmatprep.subr.mxu0 0.0
    %306 = vmatpush1.msra.mxu0 %v76
    %307 = vmatprep.subr.mxu0 0.0
    %308 = vmatpush1.msra.mxu0 %v73
    %309 = vmatprep.subr.mxu0 0.0
    %310 = vmatpush1.msra.mxu0 %v70
    %311 = vmatprep.subr.mxu0 0.0
    %312 = vmatpush1.msra.mxu0 %v67
    %313 = vmatprep.subr.mxu0 0.0
    %314 = vmatpush1.msra.mxu0 %v64
    %315 = vmatprep.subr.mxu0 0.0
    %316 = vmatpush1.msra.mxu0 %v61
    %317 = vmatprep.subr.mxu0 0.0
    %318 = vmatpush2.msra.mxu0 0.0
    %319 = vmatprep.subr.mxu0 0.0
    %320 = vmatpush2.msra.mxu0 0.0
    %321 = vmatprep.subr.mxu0 0.0
    %322 = vmatpush2.msra.mxu0 0.0
    %323 = vmatprep.subr.mxu0 0.0
    %324 = vmatpush2.msra.mxu0 0.0
    %325 = vmatprep.subr.mxu0 0.0
    %326 = vmatpush2.msra.mxu0 0.0
    %327 = vmatprep.subr.mxu0 0.0
    %328 = vmatpush2.msra.mxu0 0.0
    %329 = vmatprep.subr.mxu0 0.0
    %330 = vmatpush2.msra.mxu0 0.0
    %331 = vmatprep.subr.mxu0 0.0
    %332 = vmatpush2.msra.mxu0 0.0
    %333 = vmatprep.subr.mxu0 0.0
    %334 = vmatpush2.msra.mxu0 0.0
    %335 = vmatprep.subr.mxu0 0.0
    %336 = vmatpush2.msra.mxu0 0.0
    %337 = vmatprep.subr.mxu0 0.0
    %338 = vmatpush2.msra.mxu0 0.0
    %339 = vmatprep.subr.mxu0 0.0
    %340 = vmatpush2.msra.mxu0 0.0
    %341 = vmatprep.subr.mxu0 0.0
    %342 = vmatpush2.msra.mxu0 0.0
    %343 = vmatprep.subr.mxu0 0.0
    %344 = vmatpush2.msra.mxu0 0.0
    %345 = vmatprep.subr.mxu0 0.0
    %346 = vmatpush2.msra.mxu0 0.0
    %347 = vmatprep.subr.mxu0 0.0
    %348 = vmatpush2.msra.mxu0 0.0
    %349 = vmatprep.mubr.f32.mxu0 0.0
    %350 = vmatmul.mubr.f32.gmra.mxu0 %v43
    %v351 = vpop.f32.mrf.mxu0
    %v352 = vadd.f32 %v120, %v351
    %v353 = vpop.f32.mrf.mxu0
    %354 = vmatprep.mubr.f32.mxu0 0.0
    %355 = vmatmul.mubr.f32.gmra.mxu0 %v44
    %v356 = vpop.f32.mrf.mxu0
    %v357 = vadd.f32 %v120, %v356
    %v358 = vpop.f32.mrf.mxu0
    %359 = vmatprep.mubr.f32.mxu0 0.0
    %360 = vmatmul.mubr.f32.gmra.mxu0 %v45
    %v361 = vpop.f32.mrf.mxu0
    %v362 = vadd.f32 %v120, %v361
    %v363 = vpop.f32.mrf.mxu0
    %364 = vmatprep.mubr.f32.mxu0 0.0
    %365 = vmatmul.mubr.f32.gmra.mxu0 %v46
    %v366 = vpop.f32.mrf.mxu0
    %v367 = vadd.f32 %v120, %v366
    %v368 = vpop.f32.mrf.mxu0
    %369 = vmatprep.mubr.f32.mxu0 0.0
    %370 = vmatmul.mubr.f32.gmra.mxu0 %v47
    %v371 = vpop.f32.mrf.mxu0
    %v372 = vadd.f32 %v120, %v371
    %v373 = vpop.f32.mrf.mxu0
    %374 = vmatprep.mubr.f32.mxu0 0.0
    %375 = vmatmul.mubr.f32.gmra.mxu0 %v48
    %v376 = vpop.f32.mrf.mxu0
    %v377 = vadd.f32 %v120, %v376
    %v378 = vpop.f32.mrf.mxu0
    %379 = vmatprep.mubr.f32.mxu0 0.0
    %380 = vmatmul.mubr.f32.gmra.mxu0 %v49
    %v381 = vpop.f32.mrf.mxu0
    %v382 = vadd.f32 %v120, %v381
    %v383 = vpop.f32.mrf.mxu0
    %384 = vmatprep.mubr.f32.mxu0 0.0
    %385 = vmatmul.mubr.f32.gmra.mxu0 %v50
    %v386 = vpop.f32.mrf.mxu0
    %v387 = vadd.f32 %v120, %v386
    %v388 = vpop.f32.mrf.mxu0
    %389 = vmatprep.mubr.f32.mxu0 0.0
    %390 = vmatmul.mubr.f32.gmra.mxu0 %v51
    %v391 = vpop.f32.mrf.mxu0
    %v392 = vadd.f32 %v120, %v391
    %v393 = vpop.f32.mrf.mxu0
    %394 = vmatprep.mubr.f32.mxu0 0.0
    %395 = vmatmul.mubr.f32.gmra.mxu0 %v52
    %v396 = vpop.f32.mrf.mxu0
    %v397 = vadd.f32 %v120, %v396
    %v398 = vpop.f32.mrf.mxu0
    %399 = vmatprep.mubr.f32.mxu0 0.0
    %400 = vmatmul.mubr.f32.gmra.mxu0 %v53
    %v401 = vpop.f32.mrf.mxu0
    %v402 = vadd.f32 %v120, %v401
    %v403 = vpop.f32.mrf.mxu0
    %404 = vmatprep.mubr.f32.mxu0 0.0
    %405 = vmatmul.mubr.f32.gmra.mxu0 %v54
    %v406 = vpop.f32.mrf.mxu0
    %v407 = vadd.f32 %v120, %v406
    %v408 = vpop.f32.mrf.mxu0
    %409 = vmatprep.mubr.f32.mxu0 0.0
    %410 = vmatmul.mubr.f32.gmra.mxu0 %v55
    %v411 = vpop.f32.mrf.mxu0
    %v412 = vadd.f32 %v120, %v411
    %v413 = vpop.f32.mrf.mxu0
    %414 = vmatprep.mubr.f32.mxu0 0.0
    %415 = vmatmul.mubr.f32.gmra.mxu0 %v56
    %v416 = vpop.f32.mrf.mxu0
    %v417 = vadd.f32 %v120, %v416
    %v418 = vpop.f32.mrf.mxu0
    %419 = vmatprep.mubr.f32.mxu0 0.0
    %420 = vmatmul.mubr.f32.gmra.mxu0 %v57
    %v421 = vpop.f32.mrf.mxu0
    %v422 = vadd.f32 %v120, %v421
    %v423 = vpop.f32.mrf.mxu0
    %424 = vmatprep.mubr.f32.mxu0 0.0
    %425 = vmatmul.mubr.f32.gmra.mxu0 %v58
    %v426 = vpop.f32.mrf.mxu0
    %v427 = vadd.f32 %v120, %v426
    %v428 = vpop.f32.mrf.mxu0
    %429 = vdwg.mxu0
    %430 = vst [vmem:[#allocation7] sm:$0xff] %v191
    %431 = vst [vmem:[#allocation7 + $0x8] sm:$0xff] %v193
    %432 = vst [vmem:[#allocation7 + $0x10] sm:$0xff] %v352
    %433 = vst [vmem:[#allocation7 + $0x18] sm:$0xff] %v197
    %434 = vst [vmem:[#allocation7 + $0x20] sm:$0xff] %v199
    %435 = vst [vmem:[#allocation7 + $0x28] sm:$0xff] %v357
    %436 = vst [vmem:[#allocation7 + $0x30] sm:$0xff] %v203
    %437 = vst [vmem:[#allocation7 + $0x38] sm:$0xff] %v205
    %438 = vst [vmem:[#allocation7 + $0x40] sm:$0xff] %v362
    %439 = vst [vmem:[#allocation7 + $0x48] sm:$0xff] %v209
    %440 = vst [vmem:[#allocation7 + $0x50] sm:$0xff] %v211
    %441 = vst [vmem:[#allocation7 + $0x58] sm:$0xff] %v367
    %442 = vst [vmem:[#allocation7 + $0x60] sm:$0xff] %v215
    %443 = vst [vmem:[#allocation7 + $0x68] sm:$0xff] %v217
    %444 = vst [vmem:[#allocation7 + $0x70] sm:$0xff] %v372
    %445 = vst [vmem:[#allocation7 + $0x78] sm:$0xff] %v221
    %446 = vst [vmem:[#allocation7 + $0x80] sm:$0xff] %v223
    %447 = vst [vmem:[#allocation7 + $0x88] sm:$0xff] %v377
    %448 = vst [vmem:[#allocation7 + $0x90] sm:$0xff] %v227
    %449 = vst [vmem:[#allocation7 + $0x98] sm:$0xff] %v229
    %450 = vst [vmem:[#allocation7 + $0xa0] sm:$0xff] %v382
    %451 = vst [vmem:[#allocation7 + $0xa8] sm:$0xff] %v233
    %452 = vst [vmem:[#allocation7 + $0xb0] sm:$0xff] %v235
    %453 = vst [vmem:[#allocation7 + $0xb8] sm:$0xff] %v387
    %454 = vst [vmem:[#allocation7 + $0xc0] sm:$0xff] %v239
    %455 = vst [vmem:[#allocation7 + $0xc8] sm:$0xff] %v241
    %456 = vst [vmem:[#allocation7 + $0xd0] sm:$0xff] %v392
    %457 = vst [vmem:[#allocation7 + $0xd8] sm:$0xff] %v245
    %458 = vst [vmem:[#allocation7 + $0xe0] sm:$0xff] %v247
    %459 = vst [vmem:[#allocation7 + $0xe8] sm:$0xff] %v397
    %460 = vst [vmem:[#allocation7 + $0xf0] sm:$0xff] %v251
    %461 = vst [vmem:[#allocation7 + $0xf8] sm:$0xff] %v253
    %462 = vst [vmem:[#allocation7 + $0x100] sm:$0xff] %v402
    %463 = vst [vmem:[#allocation7 + $0x108] sm:$0xff] %v257
    %464 = vst [vmem:[#allocation7 + $0x110] sm:$0xff] %v259
    %465 = vst [vmem:[#allocation7 + $0x118] sm:$0xff] %v407
    %466 = vst [vmem:[#allocation7 + $0x120] sm:$0xff] %v263
    %467 = vst [vmem:[#allocation7 + $0x128] sm:$0xff] %v265
    %468 = vst [vmem:[#allocation7 + $0x130] sm:$0xff] %v412
    %469 = vst [vmem:[#allocation7 + $0x138] sm:$0xff] %v269
    %470 = vst [vmem:[#allocation7 + $0x140] sm:$0xff] %v271
    %471 = vst [vmem:[#allocation7 + $0x148] sm:$0xff] %v417
    %472 = vst [vmem:[#allocation7 + $0x150] sm:$0xff] %v275
    %473 = vst [vmem:[#allocation7 + $0x158] sm:$0xff] %v277
    %474 = vst [vmem:[#allocation7 + $0x160] sm:$0xff] %v422
    %475 = vst [vmem:[#allocation7 + $0x168] sm:$0xff] %v281
    %476 = vst [vmem:[#allocation7 + $0x170] sm:$0xff] %v283
    %477 = vst [vmem:[#allocation7 + $0x178] sm:$0xff] %v427
    // Predicated region
    $region22: #{tpu_custom_call.1} parent=1 // pred_check
      _
    $region23: #{tpu_custom_call.1} parent=1 // pred_check_branch
      %479 = sbr.rel (0) target = $region25
    $region24: #{tpu_custom_call.1} parent=1 // pred_region
      %s481 = ssub.s32 6144, 6144
      %482 = vsyncadd [#allocation4], %s481
      %s483 = sshll.u32 [#allocation7], 4
      %s484 = int_to_ptr.vmem [resolvable:$true] %s483
      %489 = dma.vmem_to_hbm [thread:$0]  %s484, 6144, %s3, [#allocation4], 384, 384, 24
    $region25: #{tpu_custom_call.1} parent=1 // pred_fallthru
      _
    // Predicated region
    $region26: #{tpu_custom_call.1} parent=1 // pred_check
      _
    $region27: #{tpu_custom_call.1} parent=1 // pred_check_branch
      %491 = sbr.rel (0) target = $region29
    $region28: #{tpu_custom_call.1} parent=1 // pred_region
      %492 = dma.done [#allocation4], 6144
    $region29: #{tpu_custom_call.1} parent=1 // pred_fallthru
      _
    %493 = vsyncpa [#allocation3], 1
    %494 = vsyncpa [#allocation6], 1
    %495 = vsyncpa [#allocation4], 1

</llo_original>
